<compile_context>
chip_gen: v5e
topology: v5e:2x2
jax: 0.10.0
libtpu: 0.0.40
codegen_flags: <defaults>
</compile_context>

<pallas_src>
import numpy as np

import jax
import jax.numpy as jnp
from jax.experimental import pallas as pl
from jax.experimental.pallas import tpu as pltpu


# ----------------------- fused transform matrices (exact) --------------------
def _fused_h_matrix(H, r):
    # A_h = D_h @ L, entries in {0, 1}; applied from the left: A_h @ x
    i = np.arange(H)[:, None]
    k = np.arange(H)[None, :]
    plus = (k <= np.minimum(i + r, H - 1))
    minus = (i >= r + 1) & (k <= i - r - 1)
    return plus.astype(np.float32) - minus.astype(np.float32)


def _fused_w_matrix(W, r):
    # A_w = U @ E, entries in {0, 1}; applied from the right: x @ A_w
    k = np.arange(W)[:, None]
    j = np.arange(W)[None, :]
    plus = (k <= np.minimum(j + r, W - 1))
    minus = (j >= r + 1) & (k <= j - r - 1)
    return plus.astype(np.float32) - minus.astype(np.float32)


# --------------------------------- kernel ------------------------------------
def _boxfilter_kernel(ah_ref, aw_ref, x_ref, o_ref):
    # ah_ref: (Bt*H, Bt*H) block-diag kron(I_Bt, A_h)   -- constant, resident
    # aw_ref: (W, W)                                     -- constant, resident
    # x_ref / o_ref: (Bt, H, W)
    bt, H, W = x_ref.shape
    cdt = ah_ref.dtype
    x = x_ref[...].reshape(bt * H, W).astype(cdt)          # lane dim unchanged
    y = jnp.dot(ah_ref[...], x, preferred_element_type=jnp.float32)
    out = jnp.dot(y.astype(cdt), aw_ref[...],
                  preferred_element_type=jnp.float32)
    o_ref[...] = out.reshape(bt, H, W).astype(o_ref.dtype)


# -------------------------------- wrapper ------------------------------------
def _pick_bt(B, H, W, itemsize):
    """Largest batch-of-planes per grid step s.t. the fused H-matrix and the
    per-step block stay small and Bt*H is MXU-friendly."""
    best = 1
    for bt in range(1, B + 1):
        if B % bt:
            continue
        if bt > 1 and H % 8 != 0:          # keep the (Bt,H)->Bt*H merge trivial
            continue
        rows = bt * H
        if rows > 256:                     # bound kron(I_Bt, A_h) size/waste
            continue
        if bt * H * W * itemsize > (4 << 20):
            continue
        best = bt
    return best


def box_filter(x, r):
    """x: (N, C, H, W) float array; returns (N, C, H, W) clamped box sums."""
    N, C, H, W = x.shape
    B = N * C
    xr = x.reshape(B, H, W)

    itemsize = np.dtype(x.dtype).itemsize
    compute_dtype = jnp.bfloat16 if x.dtype == jnp.bfloat16 else jnp.float32
    Bt = _pick_bt(B, H, W, itemsize)
    rows = Bt * H

    a_h = _fused_h_matrix(H, r)
    big_a_h = jnp.asarray(np.kron(np.eye(Bt, dtype=np.float32), a_h),
                          dtype=compute_dtype)              # (Bt*H, Bt*H)
    a_w = jnp.asarray(_fused_w_matrix(W, r), dtype=compute_dtype)  # (W, W)

    grid = (B // Bt,)
    mat_bytes = int(big_a_h.size * big_a_h.dtype.itemsize +
                    a_w.size * a_w.dtype.itemsize)
    blk_bytes = Bt * H * W * itemsize
    flops = grid[0] * (2 * rows * rows * W + 2 * rows * W * W)
    bytes_accessed = 2 * B * H * W * itemsize + mat_bytes
    # double-buffered in/out blocks + resident matrices + headroom;
    # cap at 48 MiB so v7x (64 MiB physical VMEM) keeps pipeline headroom.
    vmem_limit = int(min(max(4 * blk_bytes + 2 * mat_bytes + (8 << 20),
                             16 << 20), 48 << 20))

    out = pl.pallas_call(
        _boxfilter_kernel,
        out_shape=jax.ShapeDtypeStruct((B, H, W), x.dtype),
        grid_spec=pltpu.PrefetchScalarGridSpec(
            num_scalar_prefetch=0,
            grid=grid,
            in_specs=[
                pl.BlockSpec((rows, rows), lambda b: (0, 0)),   # resident A_h⊗I
                pl.BlockSpec((W, W), lambda b: (0, 0)),         # resident A_w
                pl.BlockSpec((Bt, H, W), lambda b: (b, 0, 0)),  # x planes
            ],
            out_specs=pl.BlockSpec((Bt, H, W), lambda b: (b, 0, 0)),
        ),
        compiler_params=pltpu.CompilerParams(
            dimension_semantics=("parallel",),
            vmem_limit_bytes=vmem_limit),
        cost_estimate=pl.CostEstimate(
            flops=int(flops),
            transcendentals=0,
            bytes_accessed=int(bytes_accessed)),
    )(big_a_h, a_w, xr)
    return out.reshape(N, C, H, W)


# ---------------- pure-JAX reference (mirrors the PyTorch code) --------------
def _diff_x_ref(inp, r):
    left = inp[:, :, r:2 * r + 1]
    middle = inp[:, :, 2 * r + 1:] - inp[:, :, :-2 * r - 1]
    right = inp[:, :, -1:] - inp[:, :, -2 * r - 1:-r - 1]
    return jnp.concatenate([left, middle, right], axis=2)


def _diff_y_ref(inp, r):
    left = inp[:, :, :, r:2 * r + 1]
    middle = inp[:, :, :, 2 * r + 1:] - inp[:, :, :, :-2 * r - 1]
    right = inp[:, :, :, -1:] - inp[:, :, :, -2 * r - 1:-r - 1]
    return jnp.concatenate([left, middle, right], axis=3)


def box_filter_ref(x, r):
    return _diff_y_ref(_diff_x_ref(jnp.cumsum(x, axis=2), r).cumsum(axis=3), r)


if __name__ == "__main__":
    # BoxFilter has no learned parameters; its only hyperparameter is r.
    r = 2
    N, C, H, W = 2, 4, 16, 16

    key = jax.random.PRNGKey(0)
    x = jax.random.normal(key, (N, C, H, W), dtype=jnp.float32)

    out = jax.block_until_ready(box_filter(x, r))
    ref = jax.block_until_ready(box_filter_ref(x, r))

    assert out.shape == (N, C, H, W)
    assert out.dtype == x.dtype
    np.testing.assert_allclose(np.asarray(out), np.asarray(ref),
                               rtol=1e-4, atol=1e-4)
    print("KERNEL_OK")
</pallas_src>

<mosaic_0001>
module attributes {stable_mosaic.version = 11 : i64} {
  func.func @_boxfilter_kernel(%arg0: i32, %arg1: memref<128x128xf32, #tpu.memory_space<vmem>>, %arg2: memref<16x16xf32, #tpu.memory_space<vmem>>, %arg3: memref<8x16x16xf32, #tpu.memory_space<vmem>>, %arg4: memref<8x16x16xf32, #tpu.memory_space<vmem>>) attributes {dimension_semantics = [#tpu.dimension_semantics<parallel>], iteration_bounds = array<i64: 1>, scalar_prefetch = 0 : i64, scratch_operands = 0 : i64, tpu.core_type = #tpu.core_type<tc>, window_params = [{pipeline_mode = #tpu.pipeline_mode<synchronous>, transform_indices = @transform_0, window_bounds = array<i64: 128, 128>}, {pipeline_mode = #tpu.pipeline_mode<synchronous>, transform_indices = @transform_1, window_bounds = array<i64: 16, 16>}, {transform_indices = @transform_2, window_bounds = array<i64: 8, 16, 16>}, {transform_indices = @transform_3, window_bounds = array<i64: 8, 16, 16>}]} {
    %c0 = arith.constant 0 : index
    %c0_0 = arith.constant 0 : index
    %c0_1 = arith.constant 0 : index
    %0 = vector.load %arg3[%c0, %c0_0, %c0_1] : memref<8x16x16xf32, #tpu.memory_space<vmem>>, vector<8x16x16xf32>
    %1 = vector.shape_cast %0 : vector<8x16x16xf32> to vector<128x16xf32>
    %c0_2 = arith.constant 0 : index
    %c0_3 = arith.constant 0 : index
    %2 = vector.load %arg1[%c0_2, %c0_3] : memref<128x128xf32, #tpu.memory_space<vmem>>, vector<128x128xf32>
    %cst = arith.constant dense<0.000000e+00> : vector<128x16xf32>
    %3 = tpu.matmul %2, %1, %cst {dimension_numbers = #tpu.dot_dimension_numbers<[1], [0], [0], [1], [0, 0, 1, 1], [], []>} : vector<128x128xf32>, vector<128x16xf32>, vector<128x16xf32> -> vector<128x16xf32>
    %c0_4 = arith.constant 0 : index
    %c0_5 = arith.constant 0 : index
    %4 = vector.load %arg2[%c0_4, %c0_5] : memref<16x16xf32, #tpu.memory_space<vmem>>, vector<16x16xf32>
    %cst_6 = arith.constant dense<0.000000e+00> : vector<128x16xf32>
    %5 = tpu.matmul %3, %4, %cst_6 {dimension_numbers = #tpu.dot_dimension_numbers<[1], [0], [0], [1], [0, 0, 1, 1], [], []>} : vector<128x16xf32>, vector<16x16xf32>, vector<128x16xf32> -> vector<128x16xf32>
    %6 = vector.shape_cast %5 : vector<128x16xf32> to vector<8x16x16xf32>
    %c0_7 = arith.constant 0 : index
    %c0_8 = arith.constant 0 : index
    %c0_9 = arith.constant 0 : index
    %7 = vector.load %arg4[%c0_7, %c0_8, %c0_9] : memref<8x16x16xf32, #tpu.memory_space<vmem>>, vector<8x16x16xf32>
    tpu.vector_store %arg4[%c0_7, %c0_8, %c0_9], %6 {strides = array<i32>} : memref<8x16x16xf32, #tpu.memory_space<vmem>>, vector<8x16x16xf32>,
    return
  }
  func.func @transform_0(%arg0: i32) -> (i32, i32) {
    %c0_i32 = arith.constant 0 : i32
    %c0_i32_0 = arith.constant 0 : i32
    %c0_i32_1 = arith.constant 0 : i32
    return %c0_i32, %c0_i32_0 : i32, i32
  }
  func.func @transform_1(%arg0: i32) -> (i32, i32) {
    %c0_i32 = arith.constant 0 : i32
    %c0_i32_0 = arith.constant 0 : i32
    %c0_i32_1 = arith.constant 0 : i32
    return %c0_i32, %c0_i32_0 : i32, i32
  }
  func.func @transform_2(%arg0: i32) -> (i32, i32, i32) {
    %c0_i32 = arith.constant 0 : i32
    %c0_i32_0 = arith.constant 0 : i32
    %c0_i32_1 = arith.constant 0 : i32
    return %arg0, %c0_i32, %c0_i32_0 : i32, i32, i32
  }
  func.func @transform_3(%arg0: i32) -> (i32, i32, i32) {
    %c0_i32 = arith.constant 0 : i32
    %c0_i32_0 = arith.constant 0 : i32
    %c0_i32_1 = arith.constant 0 : i32
    return %arg0, %c0_i32, %c0_i32_0 : i32, i32, i32
  }
}

</mosaic_0001>

<llo_original>
// kernel: tpu_custom_call.1
$region0: #{tpu_custom_call.1}
  #allocation0 [shape = 'u32[]', space=smem, size = 0x4, offset = 0x4, fixed_abs, tag = 'smem constant byte address 0x4 - core index']
  #allocation1 [shape = 'u32[72,128]{1,0:T(1,128)}', space=vmem, size = 0x9000, scoped, tag = 'internal scratch']
  %s0 = inlined_call_operand.hbm [shape: f32[128,128], index: 0, kind: input, shape index: {}]
  %s1 = inlined_call_operand.hbm [shape: f32[16,16], index: 1, kind: input, shape index: {}]
  %s2 = inlined_call_operand.hbm [shape: f32[8,16,16], index: 2, kind: input, shape index: {}]
  %s3 = inlined_call_operand.hbm [shape: f32[8,16,16], index: 3, kind: output, shape index: {}]
  %s4 = sld [smem:[#allocation0]]
  $region34: #{tpu_custom_call.1} parent=0
    _
  %s6 = ssub.s32 1, %s4
  %s7 = scalar_select 0, %s6, %s4
  $region1: #{tpu_custom_call.1} parent=0
    #allocation2 [shape = 'u8[65536]{0}', space=vmem, size = 0x10000, scoped, tag = 'input window, operand 0, single buffered']
    #allocation3 [shape = 's32[1]{0}', space=sflag, size = 0x4, scoped, tag = 'scoped memory for tpu_custom_call.1']
    #allocation4 [shape = 's32[1]{0}', space=sflag, size = 0x4, scoped, tag = 'scoped memory for tpu_custom_call.1']
    #allocation5 [shape = 'u8[8192]{0}', space=vmem, size = 0x2000, scoped, tag = 'input window, operand 1, single buffered']
    #allocation6 [shape = 's32[1]{0}', space=sflag, size = 0x4, scoped, tag = 'scoped memory for tpu_custom_call.1']
    #allocation7 [shape = 'u8[65536]{0}', space=vmem, size = 0x10000, scoped, tag = 'input window, operand 2, single buffered']
    #allocation8 [shape = 'u8[65536]{0}', space=vmem, size = 0x10000, scoped, tag = 'output window, operand 0, single buffered']
    %8 = vsyncpa [#allocation3], 0
    %9 = vsyncpa [#allocation6], 0
    %10 = vsyncpa [#allocation4], 0
    // Predicated region
    $region2: #{tpu_custom_call.1} parent=1 // pred_check
      _
    $region3: #{tpu_custom_call.1} parent=1 // pred_check_branch
      %12 = sbr.rel (0) target = $region5
    $region4: #{tpu_custom_call.1} parent=1 // pred_region
      %14 = vsyncadd [#allocation3], 0
      %s15 = sshll.u32 %s0, 4
      %s16 = int_to_ptr.hbm [resolvable:$true] %s15
      %s17 = sshll.u32 [#allocation2], 4
      %s18 = int_to_ptr.vmem [resolvable:$true] %s17
      %23 = dma.hbm_to_vmem [thread:$0]  %s16, 2048, %s18, [#allocation3], 128, 128, 8
    $region5: #{tpu_custom_call.1} parent=1 // pred_fallthru
      _
    // Predicated region
    $region6: #{tpu_custom_call.1} parent=1 // pred_check
      _
    $region7: #{tpu_custom_call.1} parent=1 // pred_check_branch
      %25 = sbr.rel (0) target = $region9
    $region8: #{tpu_custom_call.1} parent=1 // pred_region
      %27 = vsyncadd [#allocation6], 0
      %s28 = sshll.u32 %s1, 4
      %s29 = int_to_ptr.hbm [resolvable:$true] %s28
      %s30 = sshll.u32 [#allocation5], 4
      %s31 = int_to_ptr.vmem [resolvable:$true] %s30
      %36 = dma.hbm_to_vmem [thread:$0]  %s29, 256, %s31, [#allocation6], 128, 128, 8
    $region9: #{tpu_custom_call.1} parent=1 // pred_fallthru
      _
    // Predicated region
    $region10: #{tpu_custom_call.1} parent=1 // pred_check
      _
    $region11: #{tpu_custom_call.1} parent=1 // pred_check_branch
      %38 = sbr.rel (0) target = $region13
    $region12: #{tpu_custom_call.1} parent=1 // pred_region
      %40 = vsyncadd [#allocation6], 0
      %s41 = sshll.u32 %s2, 4
      %s42 = int_to_ptr.hbm [resolvable:$true] %s41
      %s43 = sshll.u32 [#allocation7], 4
      %s44 = int_to_ptr.vmem [resolvable:$true] %s43
      %49 = dma.hbm_to_vmem [thread:$0]  %s42, 2048, %s44, [#allocation6], 128, 128, 8
    $region13: #{tpu_custom_call.1} parent=1 // pred_fallthru
      _
    // Predicated region
    $region14: #{tpu_custom_call.1} parent=1 // pred_check
      _
    $region15: #{tpu_custom_call.1} parent=1 // pred_check_branch
      %51 = sbr.rel (0) target = $region17
    $region16: #{tpu_custom_call.1} parent=1 // pred_region
      %53 = dma.done [#allocation3], 2048
    $region17: #{tpu_custom_call.1} parent=1 // pred_fallthru
      _
    // Predicated region
    $region18: #{tpu_custom_call.1} parent=1 // pred_check
      _
    $region19: #{tpu_custom_call.1} parent=1 // pred_check_branch
      %55 = sbr.rel (0) target = $region21
    $region20: #{tpu_custom_call.1} parent=1 // pred_region
      %57 = dma.done [#allocation6], 256
    $region21: #{tpu_custom_call.1} parent=1 // pred_fallthru
      _
    // Predicated region
    $region22: #{tpu_custom_call.1} parent=1 // pred_check
      _
    $region23: #{tpu_custom_call.1} parent=1 // pred_check_branch
      %59 = sbr.rel (0) target = $region25
    $region24: #{tpu_custom_call.1} parent=1 // pred_region
      %61 = dma.done [#allocation6], 2048
    $region25: #{tpu_custom_call.1} parent=1 // pred_fallthru
      _
    %v62 = vld [vmem:[#allocation7] sm:$0xff]
    %v63 = vld [vmem:[#allocation7 + $0x8] sm:$0xff]
    %v64 = vld [vmem:[#allocation7 + $0x10] sm:$0xff]
    %v65 = vld [vmem:[#allocation7 + $0x18] sm:$0xff]
    %v66 = vld [vmem:[#allocation7 + $0x20] sm:$0xff]
    %v67 = vld [vmem:[#allocation7 + $0x28] sm:$0xff]
    %v68 = vld [vmem:[#allocation7 + $0x30] sm:$0xff]
    %v69 = vld [vmem:[#allocation7 + $0x38] sm:$0xff]
    %v70 = vld [vmem:[#allocation7 + $0x40] sm:$0xff]
    %v71 = vld [vmem:[#allocation7 + $0x48] sm:$0xff]
    %v72 = vld [vmem:[#allocation7 + $0x50] sm:$0xff]
    %v73 = vld [vmem:[#allocation7 + $0x58] sm:$0xff]
    %v74 = vld [vmem:[#allocation7 + $0x60] sm:$0xff]
    %v75 = vld [vmem:[#allocation7 + $0x68] sm:$0xff]
    %v76 = vld [vmem:[#allocation7 + $0x70] sm:$0xff]
    %v77 = vld [vmem:[#allocation7 + $0x78] sm:$0xff]
    %v78 = vld [vmem:[#allocation2] sm:$0xff]
    %v79 = vld [vmem:[#allocation2 + $0x8] sm:$0xff]
    %v80 = vld [vmem:[#allocation2 + $0x10] sm:$0xff]
    %v81 = vld [vmem:[#allocation2 + $0x18] sm:$0xff]
    %v82 = vld [vmem:[#allocation2 + $0x20] sm:$0xff]
    %v83 = vld [vmem:[#allocation2 + $0x28] sm:$0xff]
    %v84 = vld [vmem:[#allocation2 + $0x30] sm:$0xff]
    %v85 = vld [vmem:[#allocation2 + $0x38] sm:$0xff]
    %v86 = vld [vmem:[#allocation2 + $0x40] sm:$0xff]
    %v87 = vld [vmem:[#allocation2 + $0x48] sm:$0xff]
    %v88 = vld [vmem:[#allocation2 + $0x50] sm:$0xff]
    %v89 = vld [vmem:[#allocation2 + $0x58] sm:$0xff]
    %v90 = vld [vmem:[#allocation2 + $0x60] sm:$0xff]
    %v91 = vld [vmem:[#allocation2 + $0x68] sm:$0xff]
    %v92 = vld [vmem:[#allocation2 + $0x70] sm:$0xff]
    %v93 = vld [vmem:[#allocation2 + $0x78] sm:$0xff]
    %94 = vmatpush.msra.mxu0 %v77
    %95 = vmatpush.msra.mxu0 %v76
    %96 = vmatpush.msra.mxu0 %v75
    %97 = vmatpush.msra.mxu0 %v74
    %98 = vmatpush.msra.mxu0 %v73
    %99 = vmatpush.msra.mxu0 %v72
    %100 = vmatpush.msra.mxu0 %v71
    %101 = vmatpush.msra.mxu0 %v70
    %102 = vmatpush.msra.mxu0 %v69
    %103 = vmatpush.msra.mxu0 %v68
    %104 = vmatpush.msra.mxu0 %v67
    %105 = vmatpush.msra.mxu0 %v66
    %106 = vmatpush.msra.mxu0 %v65
    %107 = vmatpush.msra.mxu0 %v64
    %108 = vmatpush.msra.mxu0 %v63
    %109 = vmatpush.msra.mxu0 %v62
    %110 = vmatmul.f32.gmra.mxu0 %v78
    %v111 = vpop.f32.mrf.mxu0
    %v112 = vadd.f32 0.0, %v111
    %113 = vmatmul.f32.gmra.mxu0 %v79
    %v114 = vpop.f32.mrf.mxu0
    %v115 = vadd.f32 0.0, %v114
    %116 = vmatmul.f32.gmra.mxu0 %v80
    %v117 = vpop.f32.mrf.mxu0
    %v118 = vadd.f32 0.0, %v117
    %119 = vmatmul.f32.gmra.mxu0 %v81
    %v120 = vpop.f32.mrf.mxu0
    %v121 = vadd.f32 0.0, %v120
    %122 = vmatmul.f32.gmra.mxu0 %v82
    %v123 = vpop.f32.mrf.mxu0
    %v124 = vadd.f32 0.0, %v123
    %125 = vmatmul.f32.gmra.mxu0 %v83
    %v126 = vpop.f32.mrf.mxu0
    %v127 = vadd.f32 0.0, %v126
    %128 = vmatmul.f32.gmra.mxu0 %v84
    %v129 = vpop.f32.mrf.mxu0
    %v130 = vadd.f32 0.0, %v129
    %131 = vmatmul.f32.gmra.mxu0 %v85
    %v132 = vpop.f32.mrf.mxu0
    %v133 = vadd.f32 0.0, %v132
    %134 = vmatmul.f32.gmra.mxu0 %v86
    %v135 = vpop.f32.mrf.mxu0
    %v136 = vadd.f32 0.0, %v135
    %137 = vmatmul.f32.gmra.mxu0 %v87
    %v138 = vpop.f32.mrf.mxu0
    %v139 = vadd.f32 0.0, %v138
    %140 = vmatmul.f32.gmra.mxu0 %v88
    %v141 = vpop.f32.mrf.mxu0
    %v142 = vadd.f32 0.0, %v141
    %143 = vmatmul.f32.gmra.mxu0 %v89
    %v144 = vpop.f32.mrf.mxu0
    %v145 = vadd.f32 0.0, %v144
    %146 = vmatmul.f32.gmra.mxu0 %v90
    %v147 = vpop.f32.mrf.mxu0
    %v148 = vadd.f32 0.0, %v147
    %149 = vmatmul.f32.gmra.mxu0 %v91
    %v150 = vpop.f32.mrf.mxu0
    %v151 = vadd.f32 0.0, %v150
    %152 = vmatmul.f32.gmra.mxu0 %v92
    %v153 = vpop.f32.mrf.mxu0
    %v154 = vadd.f32 0.0, %v153
    %155 = vmatmul.f32.gmra.mxu0 %v93
    %v156 = vpop.f32.mrf.mxu0
    %v157 = vadd.f32 0.0, %v156
    %158 = vdwg.mxu0
    %v159 = vld [vmem:[#allocation5] sm:$0xff]
    %v160 = vld [vmem:[#allocation5 + $0x8] sm:$0xff]
    %vm161 = vcmask 130048
    %v163 = vsel %vm161, %v112, 0
    %v166 = vsel %vm161, %v115, 0
    %v169 = vsel %vm161, %v118, 0
    %v172 = vsel %vm161, %v121, 0
    %v175 = vsel %vm161, %v124, 0
    %v178 = vsel %vm161, %v127, 0
    %v181 = vsel %vm161, %v130, 0
    %v184 = vsel %vm161, %v133, 0
    %v187 = vsel %vm161, %v136, 0
    %v190 = vsel %vm161, %v139, 0
    %v193 = vsel %vm161, %v142, 0
    %v196 = vsel %vm161, %v145, 0
    %v199 = vsel %vm161, %v148, 0
    %v202 = vsel %vm161, %v151, 0
    %v205 = vsel %vm161, %v154, 0
    %v208 = vsel %vm161, %v157, 0
    %210 = vmatpush.msra.mxu0 0.0
    %211 = vmatpush.msra.mxu0 0.0
    %212 = vmatpush.msra.mxu0 0.0
    %213 = vmatpush.msra.mxu0 0.0
    %214 = vmatpush.msra.mxu0 0.0
    %215 = vmatpush.msra.mxu0 0.0
    %216 = vmatpush.msra.mxu0 0.0
    %217 = vmatpush.msra.mxu0 0.0
    %218 = vmatpush.msra.mxu0 0.0
    %219 = vmatpush.msra.mxu0 0.0
    %220 = vmatpush.msra.mxu0 0.0
    %221 = vmatpush.msra.mxu0 0.0
    %222 = vmatpush.msra.mxu0 0.0
    %223 = vmatpush.msra.mxu0 0.0
    %224 = vmatpush.msra.mxu0 %v160
    %225 = vmatpush.msra.mxu0 %v159
    %226 = vmatmul.f32.gmra.mxu0 %v163
    %v227 = vpop.f32.mrf.mxu0
    %v228 = vadd.f32 0.0, %v227
    %229 = vmatmul.f32.gmra.mxu0 %v166
    %v230 = vpop.f32.mrf.mxu0
    %v231 = vadd.f32 0.0, %v230
    %232 = vmatmul.f32.gmra.mxu0 %v169
    %v233 = vpop.f32.mrf.mxu0
    %v234 = vadd.f32 0.0, %v233
    %235 = vmatmul.f32.gmra.mxu0 %v172
    %v236 = vpop.f32.mrf.mxu0
    %v237 = vadd.f32 0.0, %v236
    %238 = vmatmul.f32.gmra.mxu0 %v175
    %v239 = vpop.f32.mrf.mxu0
    %v240 = vadd.f32 0.0, %v239
    %241 = vmatmul.f32.gmra.mxu0 %v178
    %v242 = vpop.f32.mrf.mxu0
    %v243 = vadd.f32 0.0, %v242
    %244 = vmatmul.f32.gmra.mxu0 %v181
    %v245 = vpop.f32.mrf.mxu0
    %v246 = vadd.f32 0.0, %v245
    %247 = vmatmul.f32.gmra.mxu0 %v184
    %v248 = vpop.f32.mrf.mxu0
    %v249 = vadd.f32 0.0, %v248
    %250 = vmatmul.f32.gmra.mxu0 %v187
    %v251 = vpop.f32.mrf.mxu0
    %v252 = vadd.f32 0.0, %v251
    %253 = vmatmul.f32.gmra.mxu0 %v190
    %v254 = vpop.f32.mrf.mxu0
    %v255 = vadd.f32 0.0, %v254
    %256 = vmatmul.f32.gmra.mxu0 %v193
    %v257 = vpop.f32.mrf.mxu0
    %v258 = vadd.f32 0.0, %v257
    %259 = vmatmul.f32.gmra.mxu0 %v196
    %v260 = vpop.f32.mrf.mxu0
    %v261 = vadd.f32 0.0, %v260
    %262 = vmatmul.f32.gmra.mxu0 %v199
    %v263 = vpop.f32.mrf.mxu0
    %v264 = vadd.f32 0.0, %v263
    %265 = vmatmul.f32.gmra.mxu0 %v202
    %v266 = vpop.f32.mrf.mxu0
    %v267 = vadd.f32 0.0, %v266
    %268 = vmatmul.f32.gmra.mxu0 %v205
    %v269 = vpop.f32.mrf.mxu0
    %v270 = vadd.f32 0.0, %v269
    %271 = vmatmul.f32.gmra.mxu0 %v208
    %v272 = vpop.f32.mrf.mxu0
    %v273 = vadd.f32 0.0, %v272
    %274 = vdwg.mxu0
    %275 = vst.msk [vmem:[#allocation8] sm:$0xff] %vm161, %v228
    %276 = vst.msk [vmem:[#allocation8 + $0x8] sm:$0xff] %vm161, %v231
    %277 = vst.msk [vmem:[#allocation8 + $0x10] sm:$0xff] %vm161, %v234
    %278 = vst.msk [vmem:[#allocation8 + $0x18] sm:$0xff] %vm161, %v237
    %279 = vst.msk [vmem:[#allocation8 + $0x20] sm:$0xff] %vm161, %v240
    %280 = vst.msk [vmem:[#allocation8 + $0x28] sm:$0xff] %vm161, %v243
    %281 = vst.msk [vmem:[#allocation8 + $0x30] sm:$0xff] %vm161, %v246
    %282 = vst.msk [vmem:[#allocation8 + $0x38] sm:$0xff] %vm161, %v249
    %283 = vst.msk [vmem:[#allocation8 + $0x40] sm:$0xff] %vm161, %v252
    %284 = vst.msk [vmem:[#allocation8 + $0x48] sm:$0xff] %vm161, %v255
    %285 = vst.msk [vmem:[#allocation8 + $0x50] sm:$0xff] %vm161, %v258
    %286 = vst.msk [vmem:[#allocation8 + $0x58] sm:$0xff] %vm161, %v261
    %287 = vst.msk [vmem:[#allocation8 + $0x60] sm:$0xff] %vm161, %v264
    %288 = vst.msk [vmem:[#allocation8 + $0x68] sm:$0xff] %vm161, %v267
    %289 = vst.msk [vmem:[#allocation8 + $0x70] sm:$0xff] %vm161, %v270
    %290 = vst.msk [vmem:[#allocation8 + $0x78] sm:$0xff] %vm161, %v273
    // Predicated region
    $region26: #{tpu_custom_call.1} parent=1 // pred_check
      _
    $region27: #{tpu_custom_call.1} parent=1 // pred_check_branch
      %292 = sbr.rel (0) target = $region29
    $region28: #{tpu_custom_call.1} parent=1 // pred_region
      %294 = vsyncadd [#allocation4], 0
      %s295 = sshll.u32 [#allocation8], 4
      %s296 = int_to_ptr.vmem [resolvable:$true] %s295
      %s297 = sshll.u32 %s3, 4
      %s298 = int_to_ptr.hbm [resolvable:$true] %s297
      %303 = dma.vmem_to_hbm [thread:$0]  %s296, 2048, %s298, [#allocation4], 128, 128, 8
    $region29: #{tpu_custom_call.1} parent=1 // pred_fallthru
      _
    // Predicated region
    $region30: #{tpu_custom_call.1} parent=1 // pred_check
      _
    $region31: #{tpu_custom_call.1} parent=1 // pred_check_branch
      %305 = sbr.rel (0) target = $region33
    $region32: #{tpu_custom_call.1} parent=1 // pred_region
      %307 = dma.done [#allocation4], 2048
    $region33: #{tpu_custom_call.1} parent=1 // pred_fallthru
      _
    %308 = vsyncpa [#allocation3], 1
    %309 = vsyncpa [#allocation6], 1
    %310 = vsyncpa [#allocation4], 1

</llo_original>
